<compile_context>
chip_gen: v5e
topology: v5e:2x2
jax: 0.10.0
libtpu: 0.0.40
codegen_flags: <defaults>
</compile_context>

<pallas_src>
import jax
import jax.numpy as jnp
from jax.experimental import pallas as pl
from jax.experimental.pallas import tpu as pltpu

OBS = 16               # observation_size
ACT = 4                # action_size
HID = 32               # encoder feature_size
OUT = OBS + 1          # observation_size + 1 (reward)   = 17
K1 = OBS + ACT         # fused layer-1 contraction dim   = 20
IN_W = K1 + OUT        # packed input width [x|a|eps]    = 37
HEAD_W = 2 * OUT       # fused [mu|logstd] head width    = 34
P_ROWS = 40            # 33 rows used (32 weight rows + 1 bias row), padded to 8k
P_COLS = 128           # one lane tile
BATCH = 8

MAX_LOGSTD = 2.0       # init values of the module's max_logstd / min_logstd params
MIN_LOGSTD = -10.0
# TODO(synk): if max_logstd / min_logstd are trained away from their init values,
# pass them as two SMEM scalars instead of baked-in constants.


def _softplus(z):
    # matches torch.nn.functional.softplus (beta=1, threshold=20)
    return jnp.where(z > 20.0, z, jnp.log1p(jnp.exp(jnp.minimum(z, 20.0))))


def dynamics_kernel(xae_ref, p_ref, out_ref):
    xae = xae_ref[...]                                    # (TB, 37)  [x | action | eps]
    p = p_ref[...]                                        # (40, 128) packed params

    xa = xae[:, :K1]                                      # (TB, 20)  concat(obs, action)
    eps = xae[:, K1:K1 + OUT]                             # (TB, 17)  rsample noise

    # --- unpack parameters (static in-register slices of one tiny buffer) ---
    w1 = p[0:K1, 0:HID]                                   # (20, 32)
    w2 = p[0:HID, HID:2 * HID]                            # (32, 32)
    wh = p[0:HID, 2 * HID:2 * HID + HEAD_W]               # (32, 34)  [wmu | wls]
    b1 = p[HID:HID + 1, 0:HID]                            # (1, 32)
    b2 = p[HID:HID + 1, HID:2 * HID]                      # (1, 32)
    bh = p[HID:HID + 1, 2 * HID:2 * HID + HEAD_W]         # (1, 34)   [bmu | bls]

    # --- encoder: two (spectral-normed) Linear + ReLU layers ---
    h1 = jnp.maximum(jnp.dot(xa, w1, preferred_element_type=jnp.float32) + b1, 0.0)
    h2 = jnp.maximum(jnp.dot(h1, w2, preferred_element_type=jnp.float32) + b2, 0.0)

    # --- fused mu / logstd heads ---
    heads = jnp.dot(h2, wh, preferred_element_type=jnp.float32) + bh
    mu = heads[:, :OUT]
    logstd = heads[:, OUT:HEAD_W]

    # soft clamping of logstd (exactly as in compute_stats)
    logstd = MAX_LOGSTD - _softplus(MAX_LOGSTD - logstd)
    logstd = MIN_LOGSTD + _softplus(logstd - MIN_LOGSTD)

    # Normal(mu, exp(logstd)).rsample() with externally supplied standard-normal eps
    pred = mu + jnp.exp(logstd) * eps                     # (TB, 17)

    # out[:, :OBS] = x + pred[:, :OBS] ; out[:, OBS] = pred[:, OBS]
    col = jax.lax.broadcasted_iota(jnp.int32, pred.shape, 1)
    x_pad = jnp.where(col < OBS, xae[:, :OUT], 0.0)       # x in cols 0..15, 0 in col 16
    out_ref[...] = pred + x_pad                           # single lane-dense store


def probabilistic_dynamics_forward(x, action, eps, packed_params, *, tb=256):
    b = x.shape[0]
    xae = jnp.concatenate([x, action, eps], axis=1).astype(jnp.float32)  # (B, 37)
    tb = b if b <= tb else tb
    assert b % tb == 0, "batch must be a multiple of the batch tile"
    grid = (b // tb,)

    out = pl.pallas_call(
        dynamics_kernel,
        out_shape=jax.ShapeDtypeStruct((b, OUT), jnp.float32),
        grid_spec=pltpu.PrefetchScalarGridSpec(
            num_scalar_prefetch=0,
            grid=grid,
            in_specs=[
                pl.BlockSpec((tb, IN_W), lambda i: (i, 0)),        # activations: tiled on batch
                pl.BlockSpec((P_ROWS, P_COLS), lambda i: (0, 0)),  # params: VMEM-resident
            ],
            out_specs=pl.BlockSpec((tb, OUT), lambda i: (i, 0)),
        ),
        compiler_params=pltpu.CompilerParams(
            dimension_semantics=("parallel",)),
    )(xae, packed_params)

    next_x = out[:, :OBS]
    next_reward = out[:, OBS:OBS + 1]
    return next_x, next_reward


# ----------------- parameter setup (plain-JAX glue) -----------------

def _linear_init(key, fan_in, fan_out):
    # deterministic init mimicking torch.nn.Linear (uniform(-1/sqrt(in), 1/sqrt(in)))
    kw, kb = jax.random.split(key)
    bound = 1.0 / jnp.sqrt(float(fan_in))
    w = jax.random.uniform(kw, (fan_in, fan_out), jnp.float32, -bound, bound)
    b = jax.random.uniform(kb, (1, fan_out), jnp.float32, -bound, bound)
    return w, b


def _spectral_normalize(w, n_iter=30):
    # Divide by the largest singular value (power iteration).
    # TODO(synk): PyTorch's spectral_norm uses a single stateful power-iteration
    # step with a randomly initialized `u`; here we run the iteration to
    # (near-)convergence, which gives the true spectral norm.
    u = jnp.ones((w.shape[0],), w.dtype) / jnp.sqrt(float(w.shape[0]))

    def body(_, u):
        v = w.T @ u
        v = v / (jnp.linalg.norm(v) + 1e-12)
        u_new = w @ v
        return u_new / (jnp.linalg.norm(u_new) + 1e-12)

    u = jax.lax.fori_loop(0, n_iter, body, u)
    v = w.T @ u
    v = v / (jnp.linalg.norm(v) + 1e-12)
    sigma = u @ (w @ v)
    return w / sigma


def make_params(key):
    """Build the (40, 128) packed parameter buffer consumed by the kernel."""
    k1, k2, k3, k4 = jax.random.split(key, 4)
    w1, b1 = _linear_init(k1, K1, HID)     # encoder layer 1 (on concat(obs, action))
    w2, b2 = _linear_init(k2, HID, HID)    # encoder layer 2
    wmu, bmu = _linear_init(k3, HID, OUT)  # mu head
    wls, bls = _linear_init(k4, HID, OUT)  # logstd head

    # spectral norm on encoder layers and mu head (NOT on logstd, per the module)
    w1 = _spectral_normalize(w1)
    w2 = _spectral_normalize(w2)
    wmu = _spectral_normalize(wmu)

    packed = jnp.zeros((P_ROWS, P_COLS), jnp.float32)
    packed = packed.at[:K1, 0:HID].set(w1)
    packed = packed.at[:HID, HID:2 * HID].set(w2)
    packed = packed.at[:HID, 2 * HID:2 * HID + OUT].set(wmu)
    packed = packed.at[:HID, 2 * HID + OUT:2 * HID + 2 * OUT].set(wls)
    packed = packed.at[HID, 0:HID].set(b1[0])
    packed = packed.at[HID, HID:2 * HID].set(b2[0])
    packed = packed.at[HID, 2 * HID:2 * HID + OUT].set(bmu[0])
    packed = packed.at[HID, 2 * HID + OUT:2 * HID + 2 * OUT].set(bls[0])
    return packed


if __name__ == "__main__":
    key = jax.random.PRNGKey(0)
    kx, ka, keps, kp = jax.random.split(key, 4)

    x = jax.random.normal(kx, (BATCH, OBS), jnp.float32)
    action = jax.random.normal(ka, (BATCH, ACT), jnp.float32)
    eps = jax.random.normal(keps, (BATCH, OUT), jnp.float32)  # rsample noise
    packed_params = make_params(kp)

    next_x, next_reward = probabilistic_dynamics_forward(x, action, eps, packed_params)
    jax.block_until_ready((next_x, next_reward))

    assert next_x.shape == (BATCH, OBS)
    assert next_reward.shape == (BATCH, 1)
    assert bool(jnp.all(jnp.isfinite(next_x))) and bool(jnp.all(jnp.isfinite(next_reward)))
    print("KERNEL_OK")
</pallas_src>

<mosaic_0001>
module attributes {stable_mosaic.version = 11 : i64} {
  func.func @dynamics_kernel(%arg0: i32, %arg1: memref<8x37xf32, #tpu.memory_space<vmem>>, %arg2: memref<40x128xf32, #tpu.memory_space<vmem>>, %arg3: memref<8x17xf32, #tpu.memory_space<vmem>>) attributes {dimension_semantics = [#tpu.dimension_semantics<parallel>], iteration_bounds = array<i64: 1>, scalar_prefetch = 0 : i64, scratch_operands = 0 : i64, tpu.core_type = #tpu.core_type<tc>, window_params = [{transform_indices = @transform_0, window_bounds = array<i64: 8, 37>}, {pipeline_mode = #tpu.pipeline_mode<synchronous>, transform_indices = @transform_1, window_bounds = array<i64: 40, 128>}, {transform_indices = @transform_2, window_bounds = array<i64: 8, 17>}]} {
    %c0 = arith.constant 0 : index
    %c0_0 = arith.constant 0 : index
    %0 = vector.load %arg1[%c0, %c0_0] : memref<8x37xf32, #tpu.memory_space<vmem>>, vector<8x37xf32>
    %c0_1 = arith.constant 0 : index
    %c0_2 = arith.constant 0 : index
    %1 = vector.load %arg2[%c0_1, %c0_2] : memref<40x128xf32, #tpu.memory_space<vmem>>, vector<40x128xf32>
    %2 = vector.extract_strided_slice %0 {offsets = [0, 0], sizes = [8, 20], strides = [1, 1]} : vector<8x37xf32> to vector<8x20xf32>
    %3 = vector.extract_strided_slice %0 {offsets = [0, 20], sizes = [8, 17], strides = [1, 1]} : vector<8x37xf32> to vector<8x17xf32>
    %4 = vector.extract_strided_slice %1 {offsets = [0, 0], sizes = [20, 32], strides = [1, 1]} : vector<40x128xf32> to vector<20x32xf32>
    %5 = vector.extract_strided_slice %1 {offsets = [0, 32], sizes = [32, 32], strides = [1, 1]} : vector<40x128xf32> to vector<32x32xf32>
    %6 = vector.extract_strided_slice %1 {offsets = [0, 64], sizes = [32, 34], strides = [1, 1]} : vector<40x128xf32> to vector<32x34xf32>
    %7 = vector.extract_strided_slice %1 {offsets = [32, 0], sizes = [1, 32], strides = [1, 1]} : vector<40x128xf32> to vector<1x32xf32>
    %8 = vector.extract_strided_slice %1 {offsets = [32, 32], sizes = [1, 32], strides = [1, 1]} : vector<40x128xf32> to vector<1x32xf32>
    %9 = vector.extract_strided_slice %1 {offsets = [32, 64], sizes = [1, 34], strides = [1, 1]} : vector<40x128xf32> to vector<1x34xf32>
    %cst = arith.constant dense<0.000000e+00> : vector<8x32xf32>
    %10 = tpu.matmul %2, %4, %cst {dimension_numbers = #tpu.dot_dimension_numbers<[1], [0], [0], [1], [0, 0, 1, 1], [], []>} : vector<8x20xf32>, vector<20x32xf32>, vector<8x32xf32> -> vector<8x32xf32>
    %11 = vector.broadcast %7 : vector<1x32xf32> to vector<8x32xf32>
    %12 = arith.addf %10, %11 : vector<8x32xf32>
    %cst_3 = arith.constant 0.000000e+00 : f32
    %13 = vector.broadcast %cst_3 : f32 to vector<8x32xf32>
    %14 = arith.maximumf %12, %13 : vector<8x32xf32>
    %cst_4 = arith.constant dense<0.000000e+00> : vector<8x32xf32>
    %15 = tpu.matmul %14, %5, %cst_4 {dimension_numbers = #tpu.dot_dimension_numbers<[1], [0], [0], [1], [0, 0, 1, 1], [], []>} : vector<8x32xf32>, vector<32x32xf32>, vector<8x32xf32> -> vector<8x32xf32>
    %16 = vector.broadcast %8 : vector<1x32xf32> to vector<8x32xf32>
    %17 = arith.addf %15, %16 : vector<8x32xf32>
    %cst_5 = arith.constant 0.000000e+00 : f32
    %18 = vector.broadcast %cst_5 : f32 to vector<8x32xf32>
    %19 = arith.maximumf %17, %18 : vector<8x32xf32>
    %cst_6 = arith.constant dense<0.000000e+00> : vector<8x34xf32>
    %20 = tpu.matmul %19, %6, %cst_6 {dimension_numbers = #tpu.dot_dimension_numbers<[1], [0], [0], [1], [0, 0, 1, 1], [], []>} : vector<8x32xf32>, vector<32x34xf32>, vector<8x34xf32> -> vector<8x34xf32>
    %21 = vector.broadcast %9 : vector<1x34xf32> to vector<8x34xf32>
    %22 = arith.addf %20, %21 : vector<8x34xf32>
    %23 = vector.extract_strided_slice %22 {offsets = [0, 0], sizes = [8, 17], strides = [1, 1]} : vector<8x34xf32> to vector<8x17xf32>
    %24 = vector.extract_strided_slice %22 {offsets = [0, 17], sizes = [8, 17], strides = [1, 1]} : vector<8x34xf32> to vector<8x17xf32>
    %cst_7 = arith.constant 2.000000e+00 : f32
    %25 = vector.broadcast %cst_7 : f32 to vector<8x17xf32>
    %26 = arith.subf %25, %24 : vector<8x17xf32>
    %cst_8 = arith.constant 2.000000e+01 : f32
    %27 = vector.broadcast %cst_8 : f32 to vector<8x17xf32>
    %28 = arith.cmpf ogt, %26, %27 : vector<8x17xf32>
    %cst_9 = arith.constant 2.000000e+01 : f32
    %29 = vector.broadcast %cst_9 : f32 to vector<8x17xf32>
    %30 = arith.minimumf %26, %29 : vector<8x17xf32>
    %31 = math.exp %30 : vector<8x17xf32>
    %32 = math.log1p %31 : vector<8x17xf32>
    %33 = arith.select %28, %26, %32 : vector<8x17xi1>, vector<8x17xf32>
    %cst_10 = arith.constant 2.000000e+00 : f32
    %34 = vector.broadcast %cst_10 : f32 to vector<8x17xf32>
    %35 = arith.subf %34, %33 : vector<8x17xf32>
    %cst_11 = arith.constant -1.000000e+01 : f32
    %36 = vector.broadcast %cst_11 : f32 to vector<8x17xf32>
    %37 = arith.subf %35, %36 : vector<8x17xf32>
    %cst_12 = arith.constant 2.000000e+01 : f32
    %38 = vector.broadcast %cst_12 : f32 to vector<8x17xf32>
    %39 = arith.cmpf ogt, %37, %38 : vector<8x17xf32>
    %cst_13 = arith.constant 2.000000e+01 : f32
    %40 = vector.broadcast %cst_13 : f32 to vector<8x17xf32>
    %41 = arith.minimumf %37, %40 : vector<8x17xf32>
    %42 = math.exp %41 : vector<8x17xf32>
    %43 = math.log1p %42 : vector<8x17xf32>
    %44 = arith.select %39, %37, %43 : vector<8x17xi1>, vector<8x17xf32>
    %cst_14 = arith.constant -1.000000e+01 : f32
    %45 = vector.broadcast %cst_14 : f32 to vector<8x17xf32>
    %46 = arith.addf %45, %44 : vector<8x17xf32>
    %47 = math.exp %46 : vector<8x17xf32>
    %48 = arith.mulf %47, %3 : vector<8x17xf32>
    %49 = arith.addf %23, %48 : vector<8x17xf32>
    %50 = tpu.iota {dimensions = array<i32: 1>} : vector<8x17xi32>
    %c16_i32 = arith.constant 16 : i32
    %51 = vector.broadcast %c16_i32 : i32 to vector<8x17xi32>
    %52 = arith.cmpi slt, %50, %51 : vector<8x17xi32>
    %53 = vector.extract_strided_slice %0 {offsets = [0, 0], sizes = [8, 17], strides = [1, 1]} : vector<8x37xf32> to vector<8x17xf32>
    %cst_15 = arith.constant 0.000000e+00 : f32
    %54 = vector.broadcast %cst_15 : f32 to vector<8x17xf32>
    %55 = arith.select %52, %53, %54 : vector<8x17xi1>, vector<8x17xf32>
    %56 = arith.addf %49, %55 : vector<8x17xf32>
    %c0_16 = arith.constant 0 : index
    %c0_17 = arith.constant 0 : index
    %57 = vector.load %arg3[%c0_16, %c0_17] : memref<8x17xf32, #tpu.memory_space<vmem>>, vector<8x17xf32>
    tpu.vector_store %arg3[%c0_16, %c0_17], %56 {strides = array<i32>} : memref<8x17xf32, #tpu.memory_space<vmem>>, vector<8x17xf32>,
    return
  }
  func.func @transform_0(%arg0: i32) -> (i32, i32) {
    %c0_i32 = arith.constant 0 : i32
    %c0_i32_0 = arith.constant 0 : i32
    return %arg0, %c0_i32 : i32, i32
  }
  func.func @transform_1(%arg0: i32) -> (i32, i32) {
    %c0_i32 = arith.constant 0 : i32
    %c0_i32_0 = arith.constant 0 : i32
    %c0_i32_1 = arith.constant 0 : i32
    return %c0_i32, %c0_i32_0 : i32, i32
  }
  func.func @transform_2(%arg0: i32) -> (i32, i32) {
    %c0_i32 = arith.constant 0 : i32
    %c0_i32_0 = arith.constant 0 : i32
    return %arg0, %c0_i32 : i32, i32
  }
}

</mosaic_0001>

<llo_original>
// kernel: tpu_custom_call.1
$region0: #{tpu_custom_call.1}
  #allocation0 [shape = 'u32[]', space=smem, size = 0x4, offset = 0x4, fixed_abs, tag = 'smem constant byte address 0x4 - core index']
  #allocation1 [shape = 'u32[72,128]{1,0:T(1,128)}', space=vmem, size = 0x9000, scoped, tag = 'internal scratch']
  %s0 = inlined_call_operand.hbm [shape: f32[8,37], index: 0, kind: input, shape index: {}]
  %s1 = inlined_call_operand.hbm [shape: f32[40,128], index: 1, kind: input, shape index: {}]
  %s2 = inlined_call_operand.hbm [shape: f32[8,17], index: 2, kind: output, shape index: {}]
  %s3 = sld [smem:[#allocation0]]
  $region26: #{tpu_custom_call.1} parent=0
    _
  %s5 = ssub.s32 1, %s3
  %s6 = scalar_select 0, %s5, %s3
  $region1: #{tpu_custom_call.1} parent=0
    #allocation2 [shape = 'u8[4096]{0}', space=vmem, size = 0x1000, scoped, tag = 'input window, operand 0, single buffered']
    #allocation3 [shape = 's32[1]{0}', space=sflag, size = 0x4, scoped, tag = 'scoped memory for tpu_custom_call.1']
    #allocation4 [shape = 's32[1]{0}', space=sflag, size = 0x4, scoped, tag = 'scoped memory for tpu_custom_call.1']
    #allocation5 [shape = 'u8[20480]{0}', space=vmem, size = 0x5000, scoped, tag = 'input window, operand 1, single buffered']
    #allocation6 [shape = 's32[1]{0}', space=sflag, size = 0x4, scoped, tag = 'scoped memory for tpu_custom_call.1']
    #allocation7 [shape = 'u8[4096]{0}', space=vmem, size = 0x1000, scoped, tag = 'output window, operand 0, single buffered']
    %7 = vsyncpa [#allocation3], 0
    %8 = vsyncpa [#allocation6], 0
    %9 = vsyncpa [#allocation4], 0
    // Predicated region
    $region2: #{tpu_custom_call.1} parent=1 // pred_check
      _
    $region3: #{tpu_custom_call.1} parent=1 // pred_check_branch
      %11 = sbr.rel (0) target = $region5
    $region4: #{tpu_custom_call.1} parent=1 // pred_region
      %13 = vsyncadd [#allocation3], 0
      %s15 = sshll.u32 %s0, 4
      %s16 = int_to_ptr.hbm [resolvable:$true] %s15
      %s17 = sshll.u32 [#allocation2], 4
      %s18 = int_to_ptr.vmem [resolvable:$true] %s17
      %20 = dma.hbm_to_vmem [thread:$0]  %s16, 128, %s18, [#allocation3]
    $region5: #{tpu_custom_call.1} parent=1 // pred_fallthru
      _
    // Predicated region
    $region6: #{tpu_custom_call.1} parent=1 // pred_check
      _
    $region7: #{tpu_custom_call.1} parent=1 // pred_check_branch
      %22 = sbr.rel (0) target = $region9
    $region8: #{tpu_custom_call.1} parent=1 // pred_region
      %24 = vsyncadd [#allocation6], 0
      %s25 = sshll.u32 %s1, 4
      %s26 = int_to_ptr.hbm [resolvable:$true] %s25
      %s27 = sshll.u32 [#allocation5], 4
      %s28 = int_to_ptr.vmem [resolvable:$true] %s27
      %33 = dma.hbm_to_vmem [thread:$0]  %s26, 640, %s28, [#allocation6], 128, 128, 8
    $region9: #{tpu_custom_call.1} parent=1 // pred_fallthru
      _
    // Predicated region
    $region10: #{tpu_custom_call.1} parent=1 // pred_check
      _
    $region11: #{tpu_custom_call.1} parent=1 // pred_check_branch
      %35 = sbr.rel (0) target = $region13
    $region12: #{tpu_custom_call.1} parent=1 // pred_region
      %37 = dma.done [#allocation3], 128
    $region13: #{tpu_custom_call.1} parent=1 // pred_fallthru
      _
    // Predicated region
    $region14: #{tpu_custom_call.1} parent=1 // pred_check
      _
    $region15: #{tpu_custom_call.1} parent=1 // pred_check_branch
      %39 = sbr.rel (0) target = $region17
    $region16: #{tpu_custom_call.1} parent=1 // pred_region
      %41 = dma.done [#allocation6], 640
    $region17: #{tpu_custom_call.1} parent=1 // pred_fallthru
      _
    %v42 = vld [vmem:[#allocation2] sm:$0xff]
    %v43 = vld [vmem:[#allocation5] sm:$0xff]
    %v44 = vld [vmem:[#allocation5 + $0x8] sm:$0xff]
    %v45 = vld [vmem:[#allocation5 + $0x10] sm:$0xff]
    %v46 = vld [vmem:[#allocation5 + $0x18] sm:$0xff]
    %v47 = vld [vmem:[#allocation5 + $0x20] sm:$0xff]
    %v48 = vperm.slane %v47, 0
    %vm49 = vcmask 162816
    %v51 = vsel %vm49, %v42, 0
    %vm53 = vcmask 1043456
    %v55 = vsel %vm53, %v45, 0
    %57 = vmatpush.msra.mxu0 0.0
    %58 = vmatpush.msra.mxu0 0.0
    %59 = vmatpush.msra.mxu0 0.0
    %60 = vmatpush.msra.mxu0 0.0
    %61 = vmatpush.msra.mxu0 0.0
    %62 = vmatpush.msra.mxu0 0.0
    %63 = vmatpush.msra.mxu0 0.0
    %64 = vmatpush.msra.mxu0 0.0
    %65 = vmatpush.msra.mxu0 0.0
    %66 = vmatpush.msra.mxu0 0.0
    %67 = vmatpush.msra.mxu0 0.0
    %68 = vmatpush.msra.mxu0 0.0
    %69 = vmatpush.msra.mxu0 0.0
    %70 = vmatpush.msra.mxu0 %v55
    %71 = vmatpush.msra.mxu0 %v44
    %72 = vmatpush.msra.mxu0 %v43
    %73 = vmatmul.f32.gmra.mxu0 %v51
    %v74 = vpop.f32.mrf.mxu0
    %v75 = vadd.f32 %v48, %v74
    %76 = vdwg.mxu0
    %v77 = vmax.f32 %v75, 0.0
    %81 = vrot.lane.b32.xlu0 %v43, 96
    %v82 = vpop.permute.xlu0 %81
    %83 = vrot.lane.b32.xlu0 %v44, 96
    %v84 = vpop.permute.xlu0 %83
    %85 = vrot.lane.b32.xlu0 %v45, 96
    %v86 = vpop.permute.xlu0 %85
    %87 = vrot.lane.b32.xlu0 %v46, 96
    %v88 = vpop.permute.xlu0 %87
    %94 = vrot.lane.b32.xlu0 %v48, 96
    %v95 = vpop.permute.xlu0 %94
    %vm97 = vcmask 261120
    %v99 = vsel %vm97, %v77, 0
    %101 = vmatpush.msra.mxu0 0.0
    %102 = vmatpush.msra.mxu0 0.0
    %103 = vmatpush.msra.mxu0 0.0
    %104 = vmatpush.msra.mxu0 0.0
    %105 = vmatpush.msra.mxu0 0.0
    %106 = vmatpush.msra.mxu0 0.0
    %107 = vmatpush.msra.mxu0 0.0
    %108 = vmatpush.msra.mxu0 0.0
    %109 = vmatpush.msra.mxu0 0.0
    %110 = vmatpush.msra.mxu0 0.0
    %111 = vmatpush.msra.mxu0 0.0
    %112 = vmatpush.msra.mxu0 0.0
    %113 = vmatpush.msra.mxu0 %v88
    %114 = vmatpush.msra.mxu0 %v86
    %115 = vmatpush.msra.mxu0 %v84
    %116 = vmatpush.msra.mxu0 %v82
    %117 = vmatmul.f32.gmra.mxu0 %v99
    %v118 = vpop.f32.mrf.mxu0
    %v119 = vadd.f32 %v95, %v118
    %120 = vdwg.mxu0
    %v121 = vmax.f32 %v119, 0.0
    %122 = vrot.lane.b32.xlu0 %v43, 64
    %v123 = vpop.permute.xlu0 %122
    %124 = vrot.lane.b32.xlu0 %v44, 64
    %v125 = vpop.permute.xlu0 %124
    %126 = vrot.lane.b32.xlu0 %v45, 64
    %v127 = vpop.permute.xlu0 %126
    %128 = vrot.lane.b32.xlu0 %v46, 64
    %v129 = vpop.permute.xlu0 %128
    %134 = vrot.lane.b32.xlu0 %v48, 64
    %v135 = vpop.permute.xlu0 %134
    %v138 = vsel %vm97, %v121, 0
    %140 = vmatpush.msra.mxu0 0.0
    %141 = vmatpush.msra.mxu0 0.0
    %142 = vmatpush.msra.mxu0 0.0
    %143 = vmatpush.msra.mxu0 0.0
    %144 = vmatpush.msra.mxu0 0.0
    %145 = vmatpush.msra.mxu0 0.0
    %146 = vmatpush.msra.mxu0 0.0
    %147 = vmatpush.msra.mxu0 0.0
    %148 = vmatpush.msra.mxu0 0.0
    %149 = vmatpush.msra.mxu0 0.0
    %150 = vmatpush.msra.mxu0 0.0
    %151 = vmatpush.msra.mxu0 0.0
    %152 = vmatpush.msra.mxu0 %v129
    %153 = vmatpush.msra.mxu0 %v127
    %154 = vmatpush.msra.mxu0 %v125
    %155 = vmatpush.msra.mxu0 %v123
    %156 = vmatmul.f32.gmra.mxu0 %v138
    %v157 = vpop.f32.mrf.mxu0
    %v158 = vadd.f32 %v135, %v157
    %159 = vdwg.mxu0
    %v160 = vsub.f32 2.0, %v158
    %vm161 = vcmp.gt.f32.partialorder %v160, 20.0
    %v162 = vmin.f32 %v160, 20.0
    %v163 = vmul.f32 %v162, 1.442695
    %v164 = vpow.pop %v163
    %v165 = vadd.f32 %v164, 1.0
    %v166 = vlog2.pop %v165
    %v167 = vmul.f32 %v166, 0.6931472
    %v168 = vmul.f32 -0.5, %v164
    %v169 = vadd.f32 %v168, 1.0
    %v170 = vmul.f32 %v169, %v164
    %v171 = vand.u32 2147483647, %v164
    %vm172 = vcmp.lt.f32.partialorder %v171, 0.0004427343
    %v173 = vsel %vm172, %v170, %v167
    %v174 = vsel %vm161, %v160, %v173
    %v175 = vsub.f32 2.0, %v174
    %v176 = vsub.f32 %v175, -10.0
    %vm177 = vcmp.gt.f32.partialorder %v176, 20.0
    %v178 = vmin.f32 %v176, 20.0
    %v179 = vmul.f32 %v178, 1.442695
    %v180 = vpow.pop %v179
    %v181 = vadd.f32 %v180, 1.0
    %v182 = vlog2.pop %v181
    %v183 = vmul.f32 %v182, 0.6931472
    %v184 = vmul.f32 -0.5, %v180
    %v185 = vadd.f32 %v184, 1.0
    %v186 = vmul.f32 %v185, %v180
    %v187 = vand.u32 2147483647, %v180
    %vm188 = vcmp.lt.f32.partialorder %v187, 0.0004427343
    %v189 = vsel %vm188, %v186, %v183
    %v190 = vsel %vm177, %v176, %v189
    %v191 = vadd.f32 %v190, -10.0
    %v192 = vmul.f32 %v191, 1.442695
    %v193 = vpow.pop %v192
    %194 = vrot.lane.b32.xlu0 %v42, 125
    %v195 = vpop.permute.xlu0 %194
    %v197 = vmul.f32 %v193, %v195
    %199 = vrot.lane.b32.xlu0 %v197, 111
    %v200 = vpop.permute.xlu0 %199
    %v202 = vadd.f32 %v158, %v200
    %v203 = vlaneseq
    %v204 = vand.u32 %v203, 127
    %vm205 = vcmp.lt.s32.totalorder %v204, 16
    %v206 = vsel %vm205, %v42, 0.0
    %v207 = vadd.f32 %v202, %v206
    %vm208 = vcmask 138240
    %209 = vst.msk [vmem:[#allocation7] sm:$0xff] %vm208, %v207
    // Predicated region
    $region18: #{tpu_custom_call.1} parent=1 // pred_check
      _
    $region19: #{tpu_custom_call.1} parent=1 // pred_check_branch
      %211 = sbr.rel (0) target = $region21
    $region20: #{tpu_custom_call.1} parent=1 // pred_region
      %213 = vsyncadd [#allocation4], 0
      %s215 = sshll.u32 [#allocation7], 4
      %s216 = int_to_ptr.vmem [resolvable:$true] %s215
      %s217 = sshll.u32 %s2, 4
      %s218 = int_to_ptr.hbm [resolvable:$true] %s217
      %220 = dma.vmem_to_hbm [thread:$0]  %s216, 128, %s218, [#allocation4]
    $region21: #{tpu_custom_call.1} parent=1 // pred_fallthru
      _
    // Predicated region
    $region22: #{tpu_custom_call.1} parent=1 // pred_check
      _
    $region23: #{tpu_custom_call.1} parent=1 // pred_check_branch
      %222 = sbr.rel (0) target = $region25
    $region24: #{tpu_custom_call.1} parent=1 // pred_region
      %224 = dma.done [#allocation4], 128
    $region25: #{tpu_custom_call.1} parent=1 // pred_fallthru
      _
    %225 = vsyncpa [#allocation3], 1
    %226 = vsyncpa [#allocation6], 1
    %227 = vsyncpa [#allocation4], 1

</llo_original>
